<compile_context>
chip_gen: v7x
topology: tpu7x:2x2x1
jax: 0.10.0
libtpu: 0.0.40
codegen_flags: <defaults>
</compile_context>

<pallas_src>
import functools

import jax
import jax.numpy as jnp
from jax.experimental import pallas as pl
from jax.experimental.pallas import tpu as pltpu


def _round_up(x, m):
    return ((x + m - 1) // m) * m


@functools.lru_cache(maxsize=None)
def _hw_params():
    """(physical VMEM bytes, TensorCores per device) — trace-time query."""
    phys_vmem = 64 * 1024 * 1024                     # conservative default (v7x)
    try:
        info = pltpu.get_tpu_info()
        phys_vmem = int(getattr(info, "vmem_capacity_bytes", phys_vmem))
    except Exception:
        pass
    num_tc = 1                                       # v5e / v6e: one TC/device
    try:
        kind = jax.devices()[0].device_kind.lower()
        if ("v7" in kind or "7x" in kind or "v5p" in kind
                or " v4" in kind or kind == "tpu v4"):
            num_tc = 2                               # v7x (2 TC/chip) / megacore
    except Exception:
        pass
    return phys_vmem, num_tc


def _transition_kernel(s_ref, w_ref, b_ref, o_ref):
    # s_ref: (tm, c) row tile; w_ref: (3, c, c) stacked weights in the MXU
    # operand dtype; b_ref: (3, 1, c) f32 biases.
    cdt = w_ref.dtype
    s_in = s_ref[...]

    x = jnp.dot(s_in.astype(cdt), w_ref[0], preferred_element_type=jnp.float32)
    x = jnp.maximum(x + b_ref[0], 0.0)

    x = jnp.dot(x.astype(cdt), w_ref[1], preferred_element_type=jnp.float32)
    x = jnp.maximum(x + b_ref[1], 0.0)

    x = jnp.dot(x.astype(cdt), w_ref[2], preferred_element_type=jnp.float32)
    x = x + b_ref[2]

    # Residual in f32 so the skip connection is not double-rounded for bf16 I/O.
    o_ref[...] = (x + s_in.astype(jnp.float32)).astype(o_ref.dtype)


@functools.partial(jax.jit, static_argnames=("tm", "compute_dtype"))
def structure_module_transition_layer(s, w1, b1, w2, b2, w3, b3, *,
                                      tm=2048, compute_dtype=None):
    """Fused AlphaFold structure-module transition layer.

    Args:
      s: [..., c] activations (f32 or bf16).
      w{1,2,3}: (c, c) weights, layout (c_in, c_out).
      b{1,2,3}: (c,) biases.
      tm: requested row-tile size (primary tuning knob; auto-clamped).
      compute_dtype: MXU operand dtype.  None = bf16 iff activations AND
        weights are bf16, else f32.  Pass jnp.bfloat16 to force the fast MXU
        path on f32 inputs (f32 accumulation is kept).
    Returns:
      [..., c] output, same dtype as `s`.
    """
    orig_shape = s.shape
    c = orig_shape[-1]
    s2d = s.reshape(-1, c)
    n = s2d.shape[0]

    if compute_dtype is None:
        all_bf16 = (s.dtype == jnp.bfloat16
                    and all(w.dtype == jnp.bfloat16 for w in (w1, w2, w3)))
        compute_dtype = jnp.bfloat16 if all_bf16 else jnp.float32
    compute_dtype = jnp.dtype(compute_dtype)

    # Lane-dense channel dim: zero-pad c up to a multiple of 128 (exact — the
    # padded rows/cols of W and the padded bias entries are 0, so they never
    # contribute to the real output columns, which we slice back out).
    cp = max(128, _round_up(c, 128))
    w_stack = jnp.stack([w1, w2, w3]).astype(compute_dtype)
    b_stack = jnp.stack([b1, b2, b3]).astype(jnp.float32)
    if cp != c:
        s2d = jnp.pad(s2d, ((0, 0), (0, cp - c)))
        w_stack = jnp.pad(w_stack, ((0, 0), (0, cp - c), (0, cp - c)))
        b_stack = jnp.pad(b_stack, ((0, 0), (0, cp - c)))
    b_stack = b_stack.reshape(3, 1, cp)

    s_bytes = jnp.dtype(s.dtype).itemsize
    w_bytes = compute_dtype.itemsize
    phys_vmem, num_tc = _hw_params()

    # Row tile: multiple of the sublane packing for s.dtype (8 f32 / 16 bf16).
    sub = max(8, 32 // s_bytes)
    tm_eff = max(sub, min(_round_up(tm, sub), _round_up(n, sub)))

    # On 2-TC devices (v7x / megacore) make the 1-D "parallel" grid a multiple
    # of num_tc tiles of near-equal size so neither core idles.  On 1-TC
    # v5e/v6e a single full-problem tile is allowed (no forced split).
    if num_tc > 1:
        tiles = _round_up(max(num_tc, pl.cdiv(n, tm_eff)), num_tc)
        tm_eff = max(sub, _round_up(pl.cdiv(n, tiles), sub))

    # VMEM budget from the chip's physical VMEM, not a hardcoded ceiling.
    # Estimate: double-buffered in/out row tiles, double-buffered resident
    # weights/biases, the live f32 copy of the input tile, f32 intermediates
    # and compute-dtype cast temporaries.
    def vmem_est(t):
        io = 2 * 2 * t * cp * s_bytes
        wts = 2 * (3 * cp * cp * w_bytes + 3 * cp * 4)
        body = 3 * t * cp * 4 + 2 * t * cp * w_bytes
        return io + wts + body

    budget = int(0.70 * phys_vmem)
    while tm_eff > sub and vmem_est(tm_eff) > budget:
        tm_eff = max(sub, _round_up(tm_eff // 2, sub))
    vmem_limit = int(min(0.90 * phys_vmem,
                         max(32 * 1024 * 1024, 1.3 * vmem_est(tm_eff))))

    grid = (pl.cdiv(n, tm_eff),)            # partial last block masked by Pallas
    row_spec = pl.BlockSpec((tm_eff, cp), lambda i: (i, 0))
    w_spec = pl.BlockSpec((3, cp, cp), lambda i: (0, 0, 0))
    b_spec = pl.BlockSpec((3, 1, cp), lambda i: (0, 0, 0))

    cost = pl.CostEstimate(
        flops=6 * n * cp * cp + 5 * n * cp,   # 3 matmuls + bias/relu/residual
        transcendentals=0,
        bytes_accessed=(2 * n * cp * s_bytes + 3 * cp * cp * w_bytes
                        + 3 * cp * 4))

    out = pl.pallas_call(
        _transition_kernel,
        out_shape=jax.ShapeDtypeStruct((n, cp), s.dtype),
        grid_spec=pltpu.PrefetchScalarGridSpec(
            num_scalar_prefetch=0,
            grid=grid,
            in_specs=[row_spec, w_spec, b_spec],
            out_specs=row_spec,
        ),
        compiler_params=pltpu.CompilerParams(
            # TODO(synk): confirm "parallel" actually shards the 1-D grid
            # across both TensorCores on v7x; otherwise switch this axis to
            # pltpu.CORE_PARALLEL.
            dimension_semantics=("parallel",),
            vmem_limit_bytes=vmem_limit),
        cost_estimate=cost,
    )(s2d, w_stack, b_stack)

    if cp != c:
        out = out[:, :c]
    return out.reshape(orig_shape)


def _reference(s, w1, b1, w2, b2, w3, b3):
    x = jnp.maximum(s @ w1 + b1, 0.0)
    x = jnp.maximum(x @ w2 + b2, 0.0)
    x = x @ w3 + b3
    return x + s


def _make_inputs(key, shape_s, c, dtype=jnp.float32):
    ks, k1, k2, k3, kb1, kb2, kb3 = jax.random.split(key, 7)
    s = jax.random.normal(ks, shape_s, dtype=jnp.float32)
    scale = 1.0 / jnp.sqrt(jnp.float32(c))
    w1 = jax.random.normal(k1, (c, c), dtype=jnp.float32) * scale
    w2 = jax.random.normal(k2, (c, c), dtype=jnp.float32) * scale
    w3 = jax.random.normal(k3, (c, c), dtype=jnp.float32) * scale
    b1 = jax.random.normal(kb1, (c,), dtype=jnp.float32) * 0.1
    b2 = jax.random.normal(kb2, (c,), dtype=jnp.float32) * 0.1
    b3 = jax.random.normal(kb3, (c,), dtype=jnp.float32) * 0.1
    args = (s, w1, b1, w2, b2, w3, b3)
    return tuple(a.astype(dtype) for a in args)


if __name__ == "__main__":
    key = jax.random.PRNGKey(0)
    k_a, k_b, k_c = jax.random.split(key, 3)

    # Case 1: small module-consistent shape (batch=2, n_res=8, c=32);
    # exercises the channel-padding (c -> 128) lane-dense path.
    args_a = _make_inputs(k_a, (2, 8, 32), 32)
    out_a = jax.block_until_ready(structure_module_transition_layer(*args_a))
    ref_a = _reference(*args_a)
    assert out_a.shape == args_a[0].shape and out_a.dtype == args_a[0].dtype
    assert jnp.allclose(out_a, ref_a, atol=1e-4, rtol=1e-4), (
        float(jnp.max(jnp.abs(out_a - ref_a))))

    # Case 2: lane-dense c=128, f32, partial last row tile on 2-TC devices.
    args_b = _make_inputs(k_b, (3, 40, 128), 128)
    out_b = jax.block_until_ready(structure_module_transition_layer(*args_b))
    ref_b = _reference(*args_b)
    assert out_b.shape == args_b[0].shape and out_b.dtype == args_b[0].dtype
    assert jnp.allclose(out_b, ref_b, atol=1e-4, rtol=1e-4), (
        float(jnp.max(jnp.abs(out_b - ref_b))))

    # Case 3: bf16 activations + bf16 weights -> bf16 MXU operands with f32
    # accumulation / residual; compared against an f32 reference.
    args_c = _make_inputs(k_c, (2, 16, 128), 128, dtype=jnp.bfloat16)
    out_c = jax.block_until_ready(structure_module_transition_layer(*args_c))
    ref_c = _reference(*(a.astype(jnp.float32) for a in args_c))
    assert out_c.shape == args_c[0].shape and out_c.dtype == jnp.bfloat16
    assert jnp.allclose(out_c.astype(jnp.float32), ref_c, atol=5e-2, rtol=5e-2), (
        float(jnp.max(jnp.abs(out_c.astype(jnp.float32) - ref_c))))

    print("KERNEL_OK")
</pallas_src>

<mosaic_0001>
module attributes {stable_mosaic.version = 11 : i64} {
  func.func @_transition_kernel(%arg0: i32, %arg1: memref<16x128xf32, #tpu.memory_space<vmem>>, %arg2: memref<3x128x128xf32, #tpu.memory_space<vmem>>, %arg3: memref<3x1x128xf32, #tpu.memory_space<vmem>>, %arg4: memref<16x128xf32, #tpu.memory_space<vmem>>) attributes {dimension_semantics = [#tpu.dimension_semantics<parallel>], iteration_bounds = array<i64: 1>, scalar_prefetch = 0 : i64, scratch_operands = 0 : i64, tpu.core_type = #tpu.core_type<tc>, window_params = [{transform_indices = @transform_0, window_bounds = array<i64: 16, 128>}, {pipeline_mode = #tpu.pipeline_mode<synchronous>, transform_indices = @transform_1, window_bounds = array<i64: 3, 128, 128>}, {pipeline_mode = #tpu.pipeline_mode<synchronous>, transform_indices = @transform_2, window_bounds = array<i64: 3, 1, 128>}, {transform_indices = @transform_3, window_bounds = array<i64: 16, 128>}]} {
    %c0 = arith.constant 0 : index
    %c0_0 = arith.constant 0 : index
    %0 = vector.load %arg1[%c0, %c0_0] : memref<16x128xf32, #tpu.memory_space<vmem>>, vector<16x128xf32>
    %c0_1 = arith.constant 0 : index
    %c0_2 = arith.constant 0 : index
    %c0_3 = arith.constant 0 : index
    %1 = vector.load %arg2[%c0_1, %c0_2, %c0_3] : memref<3x128x128xf32, #tpu.memory_space<vmem>>, vector<1x128x128xf32>
    %2 = vector.shape_cast %1 : vector<1x128x128xf32> to vector<128x128xf32>
    %cst = arith.constant dense<0.000000e+00> : vector<16x128xf32>
    %3 = tpu.matmul %0, %2, %cst {dimension_numbers = #tpu.dot_dimension_numbers<[1], [0], [0], [1], [0, 0, 1, 1], [], []>} : vector<16x128xf32>, vector<128x128xf32>, vector<16x128xf32> -> vector<16x128xf32>
    %c0_4 = arith.constant 0 : index
    %c0_5 = arith.constant 0 : index
    %c0_6 = arith.constant 0 : index
    %4 = vector.load %arg3[%c0_4, %c0_5, %c0_6] : memref<3x1x128xf32, #tpu.memory_space<vmem>>, vector<1x1x128xf32>
    %5 = vector.shape_cast %4 : vector<1x1x128xf32> to vector<1x128xf32>
    %6 = vector.broadcast %5 : vector<1x128xf32> to vector<16x128xf32>
    %7 = arith.addf %3, %6 : vector<16x128xf32>
    %cst_7 = arith.constant 0.000000e+00 : f32
    %8 = vector.broadcast %cst_7 : f32 to vector<16x128xf32>
    %9 = arith.maximumf %7, %8 : vector<16x128xf32>
    %c1 = arith.constant 1 : index
    %c0_8 = arith.constant 0 : index
    %c0_9 = arith.constant 0 : index
    %10 = vector.load %arg2[%c1, %c0_8, %c0_9] : memref<3x128x128xf32, #tpu.memory_space<vmem>>, vector<1x128x128xf32>
    %11 = vector.shape_cast %10 : vector<1x128x128xf32> to vector<128x128xf32>
    %cst_10 = arith.constant dense<0.000000e+00> : vector<16x128xf32>
    %12 = tpu.matmul %9, %11, %cst_10 {dimension_numbers = #tpu.dot_dimension_numbers<[1], [0], [0], [1], [0, 0, 1, 1], [], []>} : vector<16x128xf32>, vector<128x128xf32>, vector<16x128xf32> -> vector<16x128xf32>
    %c1_11 = arith.constant 1 : index
    %c0_12 = arith.constant 0 : index
    %c0_13 = arith.constant 0 : index
    %13 = vector.load %arg3[%c1_11, %c0_12, %c0_13] : memref<3x1x128xf32, #tpu.memory_space<vmem>>, vector<1x1x128xf32>
    %14 = vector.shape_cast %13 : vector<1x1x128xf32> to vector<1x128xf32>
    %15 = vector.broadcast %14 : vector<1x128xf32> to vector<16x128xf32>
    %16 = arith.addf %12, %15 : vector<16x128xf32>
    %cst_14 = arith.constant 0.000000e+00 : f32
    %17 = vector.broadcast %cst_14 : f32 to vector<16x128xf32>
    %18 = arith.maximumf %16, %17 : vector<16x128xf32>
    %c2 = arith.constant 2 : index
    %c0_15 = arith.constant 0 : index
    %c0_16 = arith.constant 0 : index
    %19 = vector.load %arg2[%c2, %c0_15, %c0_16] : memref<3x128x128xf32, #tpu.memory_space<vmem>>, vector<1x128x128xf32>
    %20 = vector.shape_cast %19 : vector<1x128x128xf32> to vector<128x128xf32>
    %cst_17 = arith.constant dense<0.000000e+00> : vector<16x128xf32>
    %21 = tpu.matmul %18, %20, %cst_17 {dimension_numbers = #tpu.dot_dimension_numbers<[1], [0], [0], [1], [0, 0, 1, 1], [], []>} : vector<16x128xf32>, vector<128x128xf32>, vector<16x128xf32> -> vector<16x128xf32>
    %c2_18 = arith.constant 2 : index
    %c0_19 = arith.constant 0 : index
    %c0_20 = arith.constant 0 : index
    %22 = vector.load %arg3[%c2_18, %c0_19, %c0_20] : memref<3x1x128xf32, #tpu.memory_space<vmem>>, vector<1x1x128xf32>
    %23 = vector.shape_cast %22 : vector<1x1x128xf32> to vector<1x128xf32>
    %24 = vector.broadcast %23 : vector<1x128xf32> to vector<16x128xf32>
    %25 = arith.addf %21, %24 : vector<16x128xf32>
    %26 = arith.addf %25, %0 : vector<16x128xf32>
    %c0_21 = arith.constant 0 : index
    %c0_22 = arith.constant 0 : index
    %27 = vector.load %arg4[%c0_21, %c0_22] : memref<16x128xf32, #tpu.memory_space<vmem>>, vector<16x128xf32>
    tpu.vector_store %arg4[%c0_21, %c0_22], %26 {strides = array<i32>} : memref<16x128xf32, #tpu.memory_space<vmem>>, vector<16x128xf32>,
    return
  }
  func.func @transform_0(%arg0: i32) -> (i32, i32) {
    %c0_i32 = arith.constant 0 : i32
    %c0_i32_0 = arith.constant 0 : i32
    return %arg0, %c0_i32 : i32, i32
  }
  func.func @transform_1(%arg0: i32) -> (i32, i32, i32) {
    %c0_i32 = arith.constant 0 : i32
    %c0_i32_0 = arith.constant 0 : i32
    %c0_i32_1 = arith.constant 0 : i32
    %c0_i32_2 = arith.constant 0 : i32
    return %c0_i32, %c0_i32_0, %c0_i32_1 : i32, i32, i32
  }
  func.func @transform_2(%arg0: i32) -> (i32, i32, i32) {
    %c0_i32 = arith.constant 0 : i32
    %c0_i32_0 = arith.constant 0 : i32
    %c0_i32_1 = arith.constant 0 : i32
    %c0_i32_2 = arith.constant 0 : i32
    return %c0_i32, %c0_i32_0, %c0_i32_1 : i32, i32, i32
  }
  func.func @transform_3(%arg0: i32) -> (i32, i32) {
    %c0_i32 = arith.constant 0 : i32
    %c0_i32_0 = arith.constant 0 : i32
    return %arg0, %c0_i32 : i32, i32
  }
}

</mosaic_0001>

<llo_original>
// kernel: structure_module_transition_layer.1
$region0: #{structure_module_transition_layer.1}
  #allocation0 [shape = 'u32[]', space=smem, size = 0x4, offset = 0x4, fixed_abs, tag = 'smem constant byte address 0x4 - core index']
  #allocation1 [shape = 'u32[144,128]{1,0:T(1,128)}', space=vmem, size = 0x12000, scoped, tag = 'internal scratch']
  %s0 = inlined_call_operand.vmem [shape: f32[16,128], index: 0, kind: input, shape index: {}]
  %s1 = inlined_call_operand.vmem [shape: f32[3,128,128], index: 1, kind: input, shape index: {}]
  %s2 = inlined_call_operand.vmem [shape: f32[3,1,128], index: 2, kind: input, shape index: {}]
  %s3 = inlined_call_operand.vmem [shape: f32[16,128], index: 3, kind: output, shape index: {}]
  %s4 = sld [smem:[#allocation0]]
  $region22: #{structure_module_transition_layer.1} parent=0
    _
  %s6 = ssub.s32 1, %s4
  %s7 = scalar_select 0, %s6, %s4
  // Predicated region
  $region2: #{structure_module_transition_layer.1} parent=0 // pred_check
    _
  $region3: #{structure_module_transition_layer.1} parent=0 // pred_check_branch
    %9 = sbr.rel (0) target = $region5
  $region4: #{structure_module_transition_layer.1} parent=0 // pred_region
    _
  $region5: #{structure_module_transition_layer.1} parent=0 // pred_fallthru
    _
  // Predicated region
  $region6: #{structure_module_transition_layer.1} parent=0 // pred_check
    _
  $region7: #{structure_module_transition_layer.1} parent=0 // pred_check_branch
    %11 = sbr.rel (0) target = $region9
  $region8: #{structure_module_transition_layer.1} parent=0 // pred_region
    _
  $region9: #{structure_module_transition_layer.1} parent=0 // pred_fallthru
    _
  // Predicated region
  $region10: #{structure_module_transition_layer.1} parent=0 // pred_check
    _
  $region11: #{structure_module_transition_layer.1} parent=0 // pred_check_branch
    %13 = sbr.rel (0) target = $region13
  $region12: #{structure_module_transition_layer.1} parent=0 // pred_region
    _
  $region13: #{structure_module_transition_layer.1} parent=0 // pred_fallthru
    _
  %v14 = vld [vmem:[%s0] sm:$0xff]
  %v15 = vld [vmem:[%s0 + $0x8] sm:$0xff]
  %v16 = vld [vmem:[%s1] sm:$0xff]
  %v17 = vld [vmem:[%s1 + $0x8] sm:$0xff]
  %v18 = vld [vmem:[%s1 + $0x10] sm:$0xff]
  %v19 = vld [vmem:[%s1 + $0x18] sm:$0xff]
  %v20 = vld [vmem:[%s1 + $0x20] sm:$0xff]
  %v21 = vld [vmem:[%s1 + $0x28] sm:$0xff]
  %v22 = vld [vmem:[%s1 + $0x30] sm:$0xff]
  %v23 = vld [vmem:[%s1 + $0x38] sm:$0xff]
  %v24 = vld [vmem:[%s1 + $0x40] sm:$0xff]
  %v25 = vld [vmem:[%s1 + $0x48] sm:$0xff]
  %v26 = vld [vmem:[%s1 + $0x50] sm:$0xff]
  %v27 = vld [vmem:[%s1 + $0x58] sm:$0xff]
  %v28 = vld [vmem:[%s1 + $0x60] sm:$0xff]
  %v29 = vld [vmem:[%s1 + $0x68] sm:$0xff]
  %v30 = vld [vmem:[%s1 + $0x70] sm:$0xff]
  %v31 = vld [vmem:[%s1 + $0x78] sm:$0xff]
  %v32 = vld [vmem:[%s2] sm:$0x1]
  %v34 = vlaneseq
  %v35 = vshrl.u32 %v34, 7
  %v36 = vsub.s32 0, %v35
  %v37 = vrot.slane %v32, %v36
  %39 = vmatprep.subr.mxu0 0.0
  %40 = vmatpush1.msra.mxu0 %v16
  %41 = vmatprep.subr.mxu0 0.0
  %42 = vmatpush1.msra.mxu0 %v17
  %43 = vmatprep.subr.mxu0 0.0
  %44 = vmatpush1.msra.mxu0 %v18
  %45 = vmatprep.subr.mxu0 0.0
  %46 = vmatpush1.msra.mxu0 %v19
  %47 = vmatprep.subr.mxu0 0.0
  %48 = vmatpush1.msra.mxu0 %v20
  %49 = vmatprep.subr.mxu0 0.0
  %50 = vmatpush1.msra.mxu0 %v21
  %51 = vmatprep.subr.mxu0 0.0
  %52 = vmatpush1.msra.mxu0 %v22
  %53 = vmatprep.subr.mxu0 0.0
  %54 = vmatpush1.msra.mxu0 %v23
  %55 = vmatprep.subr.mxu0 0.0
  %56 = vmatpush1.msra.mxu0 %v24
  %57 = vmatprep.subr.mxu0 0.0
  %58 = vmatpush1.msra.mxu0 %v25
  %59 = vmatprep.subr.mxu0 0.0
  %60 = vmatpush1.msra.mxu0 %v26
  %61 = vmatprep.subr.mxu0 0.0
  %62 = vmatpush1.msra.mxu0 %v27
  %63 = vmatprep.subr.mxu0 0.0
  %64 = vmatpush1.msra.mxu0 %v28
  %65 = vmatprep.subr.mxu0 0.0
  %66 = vmatpush1.msra.mxu0 %v29
  %67 = vmatprep.subr.mxu0 0.0
  %68 = vmatpush1.msra.mxu0 %v30
  %69 = vmatprep.subr.mxu0 0.0
  %70 = vmatpush1.msra.mxu0 %v31
  %71 = vmatprep.subr.mxu0 0.0
  %72 = vmatpush1.msra.mxu0 0.0
  %73 = vmatprep.subr.mxu0 0.0
  %74 = vmatpush1.msra.mxu0 0.0
  %75 = vmatprep.subr.mxu0 0.0
  %76 = vmatpush1.msra.mxu0 0.0
  %77 = vmatprep.subr.mxu0 0.0
  %78 = vmatpush1.msra.mxu0 0.0
  %79 = vmatprep.subr.mxu0 0.0
  %80 = vmatpush1.msra.mxu0 0.0
  %81 = vmatprep.subr.mxu0 0.0
  %82 = vmatpush1.msra.mxu0 0.0
  %83 = vmatprep.subr.mxu0 0.0
  %84 = vmatpush1.msra.mxu0 0.0
  %85 = vmatprep.subr.mxu0 0.0
  %86 = vmatpush1.msra.mxu0 0.0
  %87 = vmatprep.subr.mxu0 0.0
  %88 = vmatpush1.msra.mxu0 0.0
  %89 = vmatprep.subr.mxu0 0.0
  %90 = vmatpush1.msra.mxu0 0.0
  %91 = vmatprep.subr.mxu0 0.0
  %92 = vmatpush1.msra.mxu0 0.0
  %93 = vmatprep.subr.mxu0 0.0
  %94 = vmatpush1.msra.mxu0 0.0
  %95 = vmatprep.subr.mxu0 0.0
  %96 = vmatpush1.msra.mxu0 0.0
  %97 = vmatprep.subr.mxu0 0.0
  %98 = vmatpush1.msra.mxu0 0.0
  %99 = vmatprep.subr.mxu0 0.0
  %100 = vmatpush1.msra.mxu0 0.0
  %101 = vmatprep.subr.mxu0 0.0
  %102 = vmatpush1.msra.mxu0 0.0
  %103 = vmatprep.mubr.f32.mxu0 0.0
  %104 = vmatmul.mubr.f32.gmra.mrb[0].mxu0 %v14
  %v105 = vpop.f32.mrb[0].mxu0
  %v106 = vadd.f32 %v37, %v105
  %v107 = vpop.f32.mrb[0].mxu0
  %108 = vmatprep.mubr.f32.mxu0 0.0
  %109 = vmatmul.mubr.f32.gmra.mrb[0].mxu0 %v15
  %v110 = vpop.f32.mrb[0].mxu0
  %v111 = vadd.f32 %v37, %v110
  %v112 = vpop.f32.mrb[0].mxu0
  %113 = vdwg.mxu0
  %v114 = vmax.f32 %v106, 0.0
  %v115 = vmax.f32 %v111, 0.0
  %s116 = scalar_lea.vmem %s1, 128
  %v117 = vld [vmem:[%s116] sm:$0xff]
  %v118 = vld [vmem:[%s116 + $0x8] sm:$0xff]
  %v119 = vld [vmem:[%s116 + $0x10] sm:$0xff]
  %v120 = vld [vmem:[%s116 + $0x18] sm:$0xff]
  %v121 = vld [vmem:[%s116 + $0x20] sm:$0xff]
  %v122 = vld [vmem:[%s116 + $0x28] sm:$0xff]
  %v123 = vld [vmem:[%s116 + $0x30] sm:$0xff]
  %v124 = vld [vmem:[%s116 + $0x38] sm:$0xff]
  %v125 = vld [vmem:[%s116 + $0x40] sm:$0xff]
  %v126 = vld [vmem:[%s116 + $0x48] sm:$0xff]
  %v127 = vld [vmem:[%s116 + $0x50] sm:$0xff]
  %v128 = vld [vmem:[%s116 + $0x58] sm:$0xff]
  %v129 = vld [vmem:[%s116 + $0x60] sm:$0xff]
  %v130 = vld [vmem:[%s116 + $0x68] sm:$0xff]
  %v131 = vld [vmem:[%s116 + $0x70] sm:$0xff]
  %v132 = vld [vmem:[%s116 + $0x78] sm:$0xff]
  %s133 = scalar_lea.vmem %s2, 1
  %v134 = vld [vmem:[%s133] sm:$0x1]
  %v136 = vlaneseq
  %v137 = vshrl.u32 %v136, 7
  %v138 = vsub.s32 0, %v137
  %v139 = vrot.slane %v134, %v138
  %141 = vmatprep.subr.mxu0 0.0
  %142 = vmatpush1.msra.mxu0 %v117
  %143 = vmatprep.subr.mxu0 0.0
  %144 = vmatpush1.msra.mxu0 %v118
  %145 = vmatprep.subr.mxu0 0.0
  %146 = vmatpush1.msra.mxu0 %v119
  %147 = vmatprep.subr.mxu0 0.0
  %148 = vmatpush1.msra.mxu0 %v120
  %149 = vmatprep.subr.mxu0 0.0
  %150 = vmatpush1.msra.mxu0 %v121
  %151 = vmatprep.subr.mxu0 0.0
  %152 = vmatpush1.msra.mxu0 %v122
  %153 = vmatprep.subr.mxu0 0.0
  %154 = vmatpush1.msra.mxu0 %v123
  %155 = vmatprep.subr.mxu0 0.0
  %156 = vmatpush1.msra.mxu0 %v124
  %157 = vmatprep.subr.mxu0 0.0
  %158 = vmatpush1.msra.mxu0 %v125
  %159 = vmatprep.subr.mxu0 0.0
  %160 = vmatpush1.msra.mxu0 %v126
  %161 = vmatprep.subr.mxu0 0.0
  %162 = vmatpush1.msra.mxu0 %v127
  %163 = vmatprep.subr.mxu0 0.0
  %164 = vmatpush1.msra.mxu0 %v128
  %165 = vmatprep.subr.mxu0 0.0
  %166 = vmatpush1.msra.mxu0 %v129
  %167 = vmatprep.subr.mxu0 0.0
  %168 = vmatpush1.msra.mxu0 %v130
  %169 = vmatprep.subr.mxu0 0.0
  %170 = vmatpush1.msra.mxu0 %v131
  %171 = vmatprep.subr.mxu0 0.0
  %172 = vmatpush1.msra.mxu0 %v132
  %173 = vmatprep.subr.mxu0 0.0
  %174 = vmatpush1.msra.mxu0 0.0
  %175 = vmatprep.subr.mxu0 0.0
  %176 = vmatpush1.msra.mxu0 0.0
  %177 = vmatprep.subr.mxu0 0.0
  %178 = vmatpush1.msra.mxu0 0.0
  %179 = vmatprep.subr.mxu0 0.0
  %180 = vmatpush1.msra.mxu0 0.0
  %181 = vmatprep.subr.mxu0 0.0
  %182 = vmatpush1.msra.mxu0 0.0
  %183 = vmatprep.subr.mxu0 0.0
  %184 = vmatpush1.msra.mxu0 0.0
  %185 = vmatprep.subr.mxu0 0.0
  %186 = vmatpush1.msra.mxu0 0.0
  %187 = vmatprep.subr.mxu0 0.0
  %188 = vmatpush1.msra.mxu0 0.0
  %189 = vmatprep.subr.mxu0 0.0
  %190 = vmatpush1.msra.mxu0 0.0
  %191 = vmatprep.subr.mxu0 0.0
  %192 = vmatpush1.msra.mxu0 0.0
  %193 = vmatprep.subr.mxu0 0.0
  %194 = vmatpush1.msra.mxu0 0.0
  %195 = vmatprep.subr.mxu0 0.0
  %196 = vmatpush1.msra.mxu0 0.0
  %197 = vmatprep.subr.mxu0 0.0
  %198 = vmatpush1.msra.mxu0 0.0
  %199 = vmatprep.subr.mxu0 0.0
  %200 = vmatpush1.msra.mxu0 0.0
  %201 = vmatprep.subr.mxu0 0.0
  %202 = vmatpush1.msra.mxu0 0.0
  %203 = vmatprep.subr.mxu0 0.0
  %204 = vmatpush1.msra.mxu0 0.0
  %205 = vmatprep.mubr.f32.mxu0 0.0
  %206 = vmatmul.mubr.f32.gmra.mrb[0].mxu0 %v114
  %v207 = vpop.f32.mrb[0].mxu0
  %v208 = vadd.f32 %v139, %v207
  %v209 = vpop.f32.mrb[0].mxu0
  %210 = vmatprep.mubr.f32.mxu0 0.0
  %211 = vmatmul.mubr.f32.gmra.mrb[0].mxu0 %v115
  %v212 = vpop.f32.mrb[0].mxu0
  %v213 = vadd.f32 %v139, %v212
  %v214 = vpop.f32.mrb[0].mxu0
  %215 = vdwg.mxu0
  %v216 = vmax.f32 %v208, 0.0
  %v217 = vmax.f32 %v213, 0.0
  %s218 = scalar_lea.vmem %s1, 256
  %v219 = vld [vmem:[%s218] sm:$0xff]
  %v220 = vld [vmem:[%s218 + $0x8] sm:$0xff]
  %v221 = vld [vmem:[%s218 + $0x10] sm:$0xff]
  %v222 = vld [vmem:[%s218 + $0x18] sm:$0xff]
  %v223 = vld [vmem:[%s218 + $0x20] sm:$0xff]
  %v224 = vld [vmem:[%s218 + $0x28] sm:$0xff]
  %v225 = vld [vmem:[%s218 + $0x30] sm:$0xff]
  %v226 = vld [vmem:[%s218 + $0x38] sm:$0xff]
  %v227 = vld [vmem:[%s218 + $0x40] sm:$0xff]
  %v228 = vld [vmem:[%s218 + $0x48] sm:$0xff]
  %v229 = vld [vmem:[%s218 + $0x50] sm:$0xff]
  %v230 = vld [vmem:[%s218 + $0x58] sm:$0xff]
  %v231 = vld [vmem:[%s218 + $0x60] sm:$0xff]
  %v232 = vld [vmem:[%s218 + $0x68] sm:$0xff]
  %v233 = vld [vmem:[%s218 + $0x70] sm:$0xff]
  %v234 = vld [vmem:[%s218 + $0x78] sm:$0xff]
  %s235 = scalar_lea.vmem %s2, 2
  %v236 = vld [vmem:[%s235] sm:$0x1]
  %v238 = vlaneseq
  %v239 = vshrl.u32 %v238, 7
  %v240 = vsub.s32 0, %v239
  %v241 = vrot.slane %v236, %v240
  %243 = vmatprep.subr.mxu0 0.0
  %244 = vmatpush1.msra.mxu0 %v219
  %245 = vmatprep.subr.mxu0 0.0
  %246 = vmatpush1.msra.mxu0 %v220
  %247 = vmatprep.subr.mxu0 0.0
  %248 = vmatpush1.msra.mxu0 %v221
  %249 = vmatprep.subr.mxu0 0.0
  %250 = vmatpush1.msra.mxu0 %v222
  %251 = vmatprep.subr.mxu0 0.0
  %252 = vmatpush1.msra.mxu0 %v223
  %253 = vmatprep.subr.mxu0 0.0
  %254 = vmatpush1.msra.mxu0 %v224
  %255 = vmatprep.subr.mxu0 0.0
  %256 = vmatpush1.msra.mxu0 %v225
  %257 = vmatprep.subr.mxu0 0.0
  %258 = vmatpush1.msra.mxu0 %v226
  %259 = vmatprep.subr.mxu0 0.0
  %260 = vmatpush1.msra.mxu0 %v227
  %261 = vmatprep.subr.mxu0 0.0
  %262 = vmatpush1.msra.mxu0 %v228
  %263 = vmatprep.subr.mxu0 0.0
  %264 = vmatpush1.msra.mxu0 %v229
  %265 = vmatprep.subr.mxu0 0.0
  %266 = vmatpush1.msra.mxu0 %v230
  %267 = vmatprep.subr.mxu0 0.0
  %268 = vmatpush1.msra.mxu0 %v231
  %269 = vmatprep.subr.mxu0 0.0
  %270 = vmatpush1.msra.mxu0 %v232
  %271 = vmatprep.subr.mxu0 0.0
  %272 = vmatpush1.msra.mxu0 %v233
  %273 = vmatprep.subr.mxu0 0.0
  %274 = vmatpush1.msra.mxu0 %v234
  %275 = vmatprep.subr.mxu0 0.0
  %276 = vmatpush1.msra.mxu0 0.0
  %277 = vmatprep.subr.mxu0 0.0
  %278 = vmatpush1.msra.mxu0 0.0
  %279 = vmatprep.subr.mxu0 0.0
  %280 = vmatpush1.msra.mxu0 0.0
  %281 = vmatprep.subr.mxu0 0.0
  %282 = vmatpush1.msra.mxu0 0.0
  %283 = vmatprep.subr.mxu0 0.0
  %284 = vmatpush1.msra.mxu0 0.0
  %285 = vmatprep.subr.mxu0 0.0
  %286 = vmatpush1.msra.mxu0 0.0
  %287 = vmatprep.subr.mxu0 0.0
  %288 = vmatpush1.msra.mxu0 0.0
  %289 = vmatprep.subr.mxu0 0.0
  %290 = vmatpush1.msra.mxu0 0.0
  %291 = vmatprep.subr.mxu0 0.0
  %292 = vmatpush1.msra.mxu0 0.0
  %293 = vmatprep.subr.mxu0 0.0
  %294 = vmatpush1.msra.mxu0 0.0
  %295 = vmatprep.subr.mxu0 0.0
  %296 = vmatpush1.msra.mxu0 0.0
  %297 = vmatprep.subr.mxu0 0.0
  %298 = vmatpush1.msra.mxu0 0.0
  %299 = vmatprep.subr.mxu0 0.0
  %300 = vmatpush1.msra.mxu0 0.0
  %301 = vmatprep.subr.mxu0 0.0
  %302 = vmatpush1.msra.mxu0 0.0
  %303 = vmatprep.subr.mxu0 0.0
  %304 = vmatpush1.msra.mxu0 0.0
  %305 = vmatprep.subr.mxu0 0.0
  %306 = vmatpush1.msra.mxu0 0.0
  %307 = vmatprep.mubr.f32.mxu0 0.0
  %308 = vmatmul.mubr.f32.gmra.mrb[0].mxu0 %v216
  %v309 = vpop.f32.mrb[0].mxu0
  %v310 = vadd.f32 %v241, %v309
  %v311 = vpop.f32.mrb[0].mxu0
  %312 = vmatprep.mubr.f32.mxu0 0.0
  %313 = vmatmul.mubr.f32.gmra.mrb[0].mxu0 %v217
  %v314 = vpop.f32.mrb[0].mxu0
  %v315 = vadd.f32 %v241, %v314
  %v316 = vpop.f32.mrb[0].mxu0
  %317 = vdwg.mxu0
  %v318 = vadd.f32 %v310, %v14
  %v319 = vadd.f32 %v315, %v15
  %320 = vst [vmem:[%s3] sm:$0xff] %v318
  %321 = vst [vmem:[%s3 + $0x8] sm:$0xff] %v319
  // Predicated region
  $region14: #{structure_module_transition_layer.1} parent=0 // pred_check
    _
  $region15: #{structure_module_transition_layer.1} parent=0 // pred_check_branch
    %323 = sbr.rel (0) target = $region17
  $region16: #{structure_module_transition_layer.1} parent=0 // pred_region
    _
  $region17: #{structure_module_transition_layer.1} parent=0 // pred_fallthru
    _
  // Predicated region
  $region18: #{structure_module_transition_layer.1} parent=0 // pred_check
    _
  $region19: #{structure_module_transition_layer.1} parent=0 // pred_check_branch
    %325 = sbr.rel (0) target = $region21
  $region20: #{structure_module_transition_layer.1} parent=0 // pred_region
    _
  $region21: #{structure_module_transition_layer.1} parent=0 // pred_fallthru
    _

</llo_original>
